<compile_context>
chip_gen: v5e
topology: v5e:2x2
jax: 0.10.0
libtpu: 0.0.40
codegen_flags: <defaults>
</compile_context>

<pallas_src>
import math
from functools import partial

import jax
import jax.numpy as jnp
from jax.experimental import pallas as pl
from jax.experimental.pallas import tpu as pltpu


def _round_up(x, m):
    return ((x + m - 1) // m) * m


# --------------------------------------------------------------------------- #
# Kernel body
# --------------------------------------------------------------------------- #
def _leaky_gru_kernel(xh_ref, h_ref, wz_ref, wn_ref, bz_ref, bn_ref, out_ref,
                      *, one_minus_decay):
    # xh layout (bf16): cols [0:H] = hidden state, cols [H_pad:H_pad+I] = input x
    # (zero padding elsewhere).  h_ref is the matching f32 hidden tile for the
    # exact residual path.
    xh = xh_ref[...]                                   # (bm, K)  bf16
    h = h_ref[...]                                     # (bm, tn) f32

    # Two MXU matmuls (update gate, new gate): bf16 operands, f32 accumulation.
    z_pre = jnp.dot(xh, wz_ref[...],
                    preferred_element_type=jnp.float32) + bz_ref[...]
    n_pre = jnp.dot(xh, wn_ref[...],
                    preferred_element_type=jnp.float32) + bn_ref[...]

    # sigmoid(x) = 0.5*(tanh(0.5*x)+1): one EUP push instead of exp + reciprocal.
    z = 0.5 * (jnp.tanh(0.5 * z_pre) + 1.0)            # update gate
    # TODO(synk): the module's default nonlinearity=None would crash in PyTorch;
    # the standard GRU tanh is used for the new-gate nonlinearity.
    n = jnp.tanh(n_pre)                                # new gate

    # out = (1-z)*h + z*(decay*h + (1-decay)*n)  ==  h + (1-decay)*z*(n-h)
    out_ref[...] = h + one_minus_decay * (z * (n - h))


# --------------------------------------------------------------------------- #
# Parameter packing (hoisted out of the per-call path)
# --------------------------------------------------------------------------- #
def pack_leaky_gru_params(weight_ih, weight_hh, bias):
    """Pack PyTorch-layout parameters into MXU-friendly bf16 slabs.

    weight_ih: (3H, I), weight_hh: (3H, H), bias: (3H,)  [single bias, as in the module]
    Returns (wz, wn, bz, bn) with
      wz, wn : (K, H_pad) bf16, rows [0:H] = hidden contribution,
               rows [H_pad:H_pad+I] = input contribution, K = H_pad + I_pad
      bz, bn : (1, H_pad) f32
    """
    threeH, I = weight_ih.shape
    H = threeH // 3
    assert weight_hh.shape == (3 * H, H)
    assert bias.shape == (3 * H,)

    H_pad = _round_up(H, 128)                 # lane-align the gate/output dim
    I_pad = _round_up(I, 128)                 # lane-dense contraction dim
    K = H_pad + I_pad

    wih_t = weight_ih.T.astype(jnp.float32)   # (I, 3H)
    whh_t = weight_hh.T.astype(jnp.float32)   # (H, 3H)

    wz = jnp.zeros((K, H_pad), jnp.float32)
    wz = wz.at[:H, :H].set(whh_t[:, H:2 * H])
    wz = wz.at[H_pad:H_pad + I, :H].set(wih_t[:, H:2 * H])

    wn = jnp.zeros((K, H_pad), jnp.float32)
    wn = wn.at[:H, :H].set(whh_t[:, 2 * H:3 * H])
    wn = wn.at[H_pad:H_pad + I, :H].set(wih_t[:, 2 * H:3 * H])

    bz = jnp.zeros((1, H_pad), jnp.float32).at[0, :H].set(bias[H:2 * H].astype(jnp.float32))
    bn = jnp.zeros((1, H_pad), jnp.float32).at[0, :H].set(bias[2 * H:3 * H].astype(jnp.float32))

    return wz.astype(jnp.bfloat16), wn.astype(jnp.bfloat16), bz, bn


# --------------------------------------------------------------------------- #
# Tile selection / VMEM budgeting
# --------------------------------------------------------------------------- #
def _pick_bm(B):
    """Batch tile: multiple of 16 (bf16 packing), >=2 tiles when B allows
    (megacore), capped at 256, minimizing padded rows."""
    B16 = _round_up(B, 16)
    if B16 <= 16:
        return 16
    half = _round_up((B16 + 1) // 2, 16)
    return min(256, half)


def _vmem_budget(bm, K, tn, H_pad):
    grid_n = H_pad // tn
    w_buf = 1 if grid_n == 1 else 2          # grid-constant weights: single buffer
    return (2 * bm * K * 2                   # xh tiles (bf16, double-buffered)
            + 2 * bm * tn * 4                # h residual tiles (f32)
            + w_buf * 2 * K * tn * 2         # W_z + W_n tiles (bf16)
            + w_buf * 2 * tn * 4             # b_z + b_n tiles (f32)
            + 2 * bm * tn * 4                # output tiles (f32)
            + 4 * bm * tn * 4)               # in-kernel f32 intermediates (pre-acts, z, n, temps)


def _vmem_caps():
    try:
        physical = int(pltpu.get_tpu_info().vmem_capacity_bytes)
    except Exception:
        physical = 64 << 20                  # conservative (v7x per-TC VMEM)
    usable = min(int(physical * 0.8), 100 << 20)
    return physical, usable


def _select_tiles(B, H_pad, K, usable_vmem):
    bm = _pick_bm(B)
    m = H_pad // 128
    # tn must divide H_pad exactly (so every gate-column tile maps to a valid h slice).
    tn_cands = sorted((128 * d for d in range(1, m + 1) if m % d == 0), reverse=True)
    while True:
        for tn in tn_cands:
            if _vmem_budget(bm, K, tn, H_pad) + (8 << 20) <= usable_vmem:
                return bm, tn
        if bm <= 16:
            return bm, tn_cands[-1]          # pathological shapes: smallest tiles
        bm = max(16, _round_up(bm // 2, 16))


# --------------------------------------------------------------------------- #
# Wrapper
# --------------------------------------------------------------------------- #
def leaky_gru_cell_packed(x, h, packed, *, decay=0.9):
    """x: (B, I), h: (B, H), packed = pack_leaky_gru_params(...)."""
    wz, wn, bz, bn = packed
    B, I = x.shape
    _, H = h.shape
    K, H_pad = wz.shape
    I_pad = K - H_pad
    assert I <= I_pad and H <= H_pad

    # NOTE: decay is baked in as a static Python float; a traced/learned decay
    # would need to be passed as a (1,1) SMEM/VMEM operand instead.
    one_minus_decay = float(1.0 - decay)

    physical_vmem, usable_vmem = _vmem_caps()
    bm, tn = _select_tiles(B, H_pad, K, usable_vmem)
    B_pad = _round_up(B, bm)
    grid_b = B_pad // bm
    grid_n = H_pad // tn

    # Activation packing: bf16 matmul operand [h | x] and an exact-f32 h residual.
    xh_bf = jnp.zeros((B_pad, K), jnp.bfloat16)
    xh_bf = xh_bf.at[:B, :H].set(h.astype(jnp.bfloat16))
    xh_bf = xh_bf.at[:B, H_pad:H_pad + I].set(x.astype(jnp.bfloat16))
    h32 = jnp.zeros((B_pad, H_pad), jnp.float32).at[:B, :H].set(h.astype(jnp.float32))

    budget = _vmem_budget(bm, K, tn, H_pad)
    vmem_limit = max(32 << 20, min(physical_vmem, budget + (8 << 20)))

    cost = pl.CostEstimate(
        flops=4 * B_pad * K * H_pad,                 # two (bm,K)x(K,tn) matmuls per tile
        transcendentals=2 * B_pad * H_pad,           # one tanh per gate element
        bytes_accessed=(B_pad * K * 2 + B_pad * H_pad * 4
                        + 2 * K * H_pad * 2 + 2 * H_pad * 4
                        + B_pad * H_pad * 4))

    kernel = partial(_leaky_gru_kernel, one_minus_decay=one_minus_decay)
    single_buffer_consts = (grid_n == 1)             # weight/bias block index is grid-constant

    def _make_call(use_single_buffer):
        def cspec(shape, imap):
            if use_single_buffer:
                return pl.BlockSpec(shape, imap, pipeline_mode=pl.Buffered(1))
            return pl.BlockSpec(shape, imap)

        in_specs = [
            pl.BlockSpec((bm, K), lambda i, j: (i, 0)),     # xh: batch-tiled, column-invariant
            pl.BlockSpec((bm, tn), lambda i, j: (i, j)),    # h residual tile
            cspec((K, tn), lambda i, j: (0, j)),            # W_z (streams when grid_n > 1)
            cspec((K, tn), lambda i, j: (0, j)),            # W_n
            cspec((1, tn), lambda i, j: (0, j)),            # b_z
            cspec((1, tn), lambda i, j: (0, j)),            # b_n
        ]
        return pl.pallas_call(
            kernel,
            out_shape=jax.ShapeDtypeStruct((B_pad, H_pad), jnp.float32),
            grid=(grid_b, grid_n),
            in_specs=in_specs,
            out_specs=pl.BlockSpec((bm, tn), lambda i, j: (i, j)),
            compiler_params=pltpu.CompilerParams(
                dimension_semantics=("parallel", "arbitrary"),
                vmem_limit_bytes=vmem_limit),
            cost_estimate=cost,
        )

    args = (xh_bf, h32, wz, wn, bz, bn)
    if single_buffer_consts:
        try:
            out_pad = _make_call(True)(*args)
        except Exception:
            # TODO(synk): drop this fallback once pipeline_mode=pl.Buffered(1) is
            # confirmed on the installed JAX; default double-buffering is correct,
            # just uses one extra copy of the (already VMEM-budgeted) weight slab.
            out_pad = _make_call(False)(*args)
    else:
        out_pad = _make_call(False)(*args)

    return out_pad[:B, :H]


def leaky_gru_cell(x, h, weight_ih, weight_hh, bias, *, decay=0.9):
    """Convenience wrapper (packs parameters per call). Prefer packing once via
    pack_leaky_gru_params + leaky_gru_cell_packed for repeated use."""
    packed = pack_leaky_gru_params(weight_ih, weight_hh, bias)
    return leaky_gru_cell_packed(x, h, packed, decay=decay)


# --------------------------------------------------------------------------- #
# Reference + init (for the self-test)
# --------------------------------------------------------------------------- #
def _reference(x, h, weight_ih, weight_hh, bias, decay=0.9):
    gates = x @ weight_ih.T + h @ weight_hh.T + bias
    H = h.shape[1]
    u = jax.nn.sigmoid(gates[:, H:2 * H])
    n = jnp.tanh(gates[:, 2 * H:])
    new_hidden = decay * h + (1.0 - decay) * n
    return (1.0 - u) * h + u * new_hidden


def _init_params(key, input_size, hidden_size):
    """Deterministic kaiming_uniform_(a=sqrt(5)) equivalent: bound = 1/sqrt(fan_in)."""
    k_ih, k_hh, k_b = jax.random.split(key, 3)
    bound_ih = 1.0 / math.sqrt(input_size)
    bound_hh = 1.0 / math.sqrt(hidden_size)
    weight_ih = jax.random.uniform(
        k_ih, (3 * hidden_size, input_size), jnp.float32, -bound_ih, bound_ih)
    weight_hh = jax.random.uniform(
        k_hh, (3 * hidden_size, hidden_size), jnp.float32, -bound_hh, bound_hh)
    bias = jax.random.uniform(
        k_b, (3 * hidden_size,), jnp.float32, -bound_ih, bound_ih)
    return weight_ih, weight_hh, bias


if __name__ == "__main__":
    key = jax.random.PRNGKey(0)
    k_x, k_h, k_p = jax.random.split(key, 3)

    batch = 8
    input_size = 16
    hidden_size = 32
    decay = 0.9

    x = jax.random.normal(k_x, (batch, input_size), jnp.float32)
    h = jax.random.normal(k_h, (batch, hidden_size), jnp.float32)
    weight_ih, weight_hh, bias = _init_params(k_p, input_size, hidden_size)

    # Parameter packing hoisted out of the per-call path.
    packed = pack_leaky_gru_params(weight_ih, weight_hh, bias)

    out = leaky_gru_cell_packed(x, h, packed, decay=decay)
    out = jax.block_until_ready(out)

    ref = _reference(x, h, weight_ih, weight_hh, bias, decay=decay)
    assert out.shape == (batch, hidden_size)
    # bf16 matmul operands (f32 accumulation) -> loosened tolerance vs f32 reference.
    assert jnp.allclose(out, ref, atol=2e-2, rtol=2e-2), "mismatch vs JAX reference"

    print("KERNEL_OK")
</pallas_src>

<mosaic_0001>
module attributes {stable_mosaic.version = 11 : i64} {
  func.func @_leaky_gru_kernel(%arg0: i32, %arg1: i32, %arg2: memref<16x256xbf16, #tpu.memory_space<vmem>>, %arg3: memref<16x128xf32, #tpu.memory_space<vmem>>, %arg4: memref<256x128xbf16, #tpu.memory_space<vmem>>, %arg5: memref<256x128xbf16, #tpu.memory_space<vmem>>, %arg6: memref<1x128xf32, #tpu.memory_space<vmem>>, %arg7: memref<1x128xf32, #tpu.memory_space<vmem>>, %arg8: memref<16x128xf32, #tpu.memory_space<vmem>>) attributes {dimension_semantics = [#tpu.dimension_semantics<parallel>, #tpu.dimension_semantics<arbitrary>], iteration_bounds = array<i64: 1, 1>, scalar_prefetch = 0 : i64, scratch_operands = 0 : i64, tpu.core_type = #tpu.core_type<tc>, window_params = [{transform_indices = @transform_0, window_bounds = array<i64: 16, 256>}, {transform_indices = @transform_1, window_bounds = array<i64: 16, 128>}, {pipeline_mode = #tpu.pipeline_mode<synchronous>, transform_indices = @transform_2, window_bounds = array<i64: 256, 128>}, {pipeline_mode = #tpu.pipeline_mode<synchronous>, transform_indices = @transform_3, window_bounds = array<i64: 256, 128>}, {pipeline_mode = #tpu.pipeline_mode<synchronous>, transform_indices = @transform_4, window_bounds = array<i64: 1, 128>}, {pipeline_mode = #tpu.pipeline_mode<synchronous>, transform_indices = @transform_5, window_bounds = array<i64: 1, 128>}, {transform_indices = @transform_6, window_bounds = array<i64: 16, 128>}]} {
    %c0 = arith.constant 0 : index
    %c0_0 = arith.constant 0 : index
    %0 = vector.load %arg2[%c0, %c0_0] : memref<16x256xbf16, #tpu.memory_space<vmem>>, vector<16x256xbf16>
    %c0_1 = arith.constant 0 : index
    %c0_2 = arith.constant 0 : index
    %1 = vector.load %arg3[%c0_1, %c0_2] : memref<16x128xf32, #tpu.memory_space<vmem>>, vector<16x128xf32>
    %c0_3 = arith.constant 0 : index
    %c0_4 = arith.constant 0 : index
    %2 = vector.load %arg4[%c0_3, %c0_4] : memref<256x128xbf16, #tpu.memory_space<vmem>>, vector<256x128xbf16>
    %cst = arith.constant dense<0.000000e+00> : vector<16x128xf32>
    %3 = tpu.matmul %0, %2, %cst {dimension_numbers = #tpu.dot_dimension_numbers<[1], [0], [0], [1], [0, 0, 1, 1], [], []>} : vector<16x256xbf16>, vector<256x128xbf16>, vector<16x128xf32> -> vector<16x128xf32>
    %c0_5 = arith.constant 0 : index
    %c0_6 = arith.constant 0 : index
    %4 = vector.load %arg6[%c0_5, %c0_6] : memref<1x128xf32, #tpu.memory_space<vmem>>, vector<1x128xf32>
    %5 = vector.broadcast %4 : vector<1x128xf32> to vector<16x128xf32>
    %6 = arith.addf %3, %5 : vector<16x128xf32>
    %c0_7 = arith.constant 0 : index
    %c0_8 = arith.constant 0 : index
    %7 = vector.load %arg5[%c0_7, %c0_8] : memref<256x128xbf16, #tpu.memory_space<vmem>>, vector<256x128xbf16>
    %cst_9 = arith.constant dense<0.000000e+00> : vector<16x128xf32>
    %8 = tpu.matmul %0, %7, %cst_9 {dimension_numbers = #tpu.dot_dimension_numbers<[1], [0], [0], [1], [0, 0, 1, 1], [], []>} : vector<16x256xbf16>, vector<256x128xbf16>, vector<16x128xf32> -> vector<16x128xf32>
    %c0_10 = arith.constant 0 : index
    %c0_11 = arith.constant 0 : index
    %9 = vector.load %arg7[%c0_10, %c0_11] : memref<1x128xf32, #tpu.memory_space<vmem>>, vector<1x128xf32>
    %10 = vector.broadcast %9 : vector<1x128xf32> to vector<16x128xf32>
    %11 = arith.addf %8, %10 : vector<16x128xf32>
    %cst_12 = arith.constant 5.000000e-01 : f32
    %12 = vector.broadcast %cst_12 : f32 to vector<16x128xf32>
    %13 = arith.mulf %12, %6 : vector<16x128xf32>
    %14 = math.tanh %13 : vector<16x128xf32>
    %cst_13 = arith.constant 1.000000e+00 : f32
    %15 = vector.broadcast %cst_13 : f32 to vector<16x128xf32>
    %16 = arith.addf %14, %15 : vector<16x128xf32>
    %cst_14 = arith.constant 5.000000e-01 : f32
    %17 = vector.broadcast %cst_14 : f32 to vector<16x128xf32>
    %18 = arith.mulf %17, %16 : vector<16x128xf32>
    %19 = math.tanh %11 : vector<16x128xf32>
    %20 = arith.subf %19, %1 : vector<16x128xf32>
    %21 = arith.mulf %18, %20 : vector<16x128xf32>
    %cst_15 = arith.constant 1.000000e-01 : f32
    %22 = vector.broadcast %cst_15 : f32 to vector<16x128xf32>
    %23 = arith.mulf %22, %21 : vector<16x128xf32>
    %24 = arith.addf %1, %23 : vector<16x128xf32>
    %c0_16 = arith.constant 0 : index
    %c0_17 = arith.constant 0 : index
    %25 = vector.load %arg8[%c0_16, %c0_17] : memref<16x128xf32, #tpu.memory_space<vmem>>, vector<16x128xf32>
    tpu.vector_store %arg8[%c0_16, %c0_17], %24 {strides = array<i32>} : memref<16x128xf32, #tpu.memory_space<vmem>>, vector<16x128xf32>,
    return
  }
  func.func @transform_0(%arg0: i32, %arg1: i32) -> (i32, i32) {
    %c0_i32 = arith.constant 0 : i32
    %c0_i32_0 = arith.constant 0 : i32
    return %arg0, %c0_i32 : i32, i32
  }
  func.func @transform_1(%arg0: i32, %arg1: i32) -> (i32, i32) {
    %c0_i32 = arith.constant 0 : i32
    return %arg0, %arg1 : i32, i32
  }
  func.func @transform_2(%arg0: i32, %arg1: i32) -> (i32, i32) {
    %c0_i32 = arith.constant 0 : i32
    %c0_i32_0 = arith.constant 0 : i32
    return %c0_i32, %arg1 : i32, i32
  }
  func.func @transform_3(%arg0: i32, %arg1: i32) -> (i32, i32) {
    %c0_i32 = arith.constant 0 : i32
    %c0_i32_0 = arith.constant 0 : i32
    return %c0_i32, %arg1 : i32, i32
  }
  func.func @transform_4(%arg0: i32, %arg1: i32) -> (i32, i32) {
    %c0_i32 = arith.constant 0 : i32
    %c0_i32_0 = arith.constant 0 : i32
    return %c0_i32, %arg1 : i32, i32
  }
  func.func @transform_5(%arg0: i32, %arg1: i32) -> (i32, i32) {
    %c0_i32 = arith.constant 0 : i32
    %c0_i32_0 = arith.constant 0 : i32
    return %c0_i32, %arg1 : i32, i32
  }
  func.func @transform_6(%arg0: i32, %arg1: i32) -> (i32, i32) {
    %c0_i32 = arith.constant 0 : i32
    return %arg0, %arg1 : i32, i32
  }
}

module attributes {stable_mosaic.version = 11 : i64} {
  func.func @_leaky_gru_kernel(%arg0: i32, %arg1: i32, %arg2: memref<16x256xbf16, #tpu.memory_space<vmem>>, %arg3: memref<16x128xf32, #tpu.memory_space<vmem>>, %arg4: memref<256x128xbf16, #tpu.memory_space<vmem>>, %arg5: memref<256x128xbf16, #tpu.memory_space<vmem>>, %arg6: memref<1x128xf32, #tpu.memory_space<vmem>>, %arg7: memref<1x128xf32, #tpu.memory_space<vmem>>, %arg8: memref<16x128xf32, #tpu.memory_space<vmem>>) attributes {dimension_semantics = [#tpu.dimension_semantics<parallel>, #tpu.dimension_semantics<arbitrary>], iteration_bounds = array<i64: 1, 1>, scalar_prefetch = 0 : i64, scratch_operands = 0 : i64, tpu.core_type = #tpu.core_type<tc>, window_params = [{transform_indices = @transform_0, window_bounds = array<i64: 16, 256>}, {transform_indices = @transform_1, window_bounds = array<i64: 16, 128>}, {transform_indices = @transform_2, window_bounds = array<i64: 256, 128>}, {transform_indices = @transform_3, window_bounds = array<i64: 256, 128>}, {transform_indices = @transform_4, window_bounds = array<i64: 1, 128>}, {transform_indices = @transform_5, window_bounds = array<i64: 1, 128>}, {transform_indices = @transform_6, window_bounds = array<i64: 16, 128>}]} {
    %c0 = arith.constant 0 : index
    %c0_0 = arith.constant 0 : index
    %0 = vector.load %arg2[%c0, %c0_0] : memref<16x256xbf16, #tpu.memory_space<vmem>>, vector<16x256xbf16>
    %c0_1 = arith.constant 0 : index
    %c0_2 = arith.constant 0 : index
    %1 = vector.load %arg3[%c0_1, %c0_2] : memref<16x128xf32, #tpu.memory_space<vmem>>, vector<16x128xf32>
    %c0_3 = arith.constant 0 : index
    %c0_4 = arith.constant 0 : index
    %2 = vector.load %arg4[%c0_3, %c0_4] : memref<256x128xbf16, #tpu.memory_space<vmem>>, vector<256x128xbf16>
    %cst = arith.constant dense<0.000000e+00> : vector<16x128xf32>
    %3 = tpu.matmul %0, %2, %cst {dimension_numbers = #tpu.dot_dimension_numbers<[1], [0], [0], [1], [0, 0, 1, 1], [], []>} : vector<16x256xbf16>, vector<256x128xbf16>, vector<16x128xf32> -> vector<16x128xf32>
    %c0_5 = arith.constant 0 : index
    %c0_6 = arith.constant 0 : index
    %4 = vector.load %arg6[%c0_5, %c0_6] : memref<1x128xf32, #tpu.memory_space<vmem>>, vector<1x128xf32>
    %5 = vector.broadcast %4 : vector<1x128xf32> to vector<16x128xf32>
    %6 = arith.addf %3, %5 : vector<16x128xf32>
    %c0_7 = arith.constant 0 : index
    %c0_8 = arith.constant 0 : index
    %7 = vector.load %arg5[%c0_7, %c0_8] : memref<256x128xbf16, #tpu.memory_space<vmem>>, vector<256x128xbf16>
    %cst_9 = arith.constant dense<0.000000e+00> : vector<16x128xf32>
    %8 = tpu.matmul %0, %7, %cst_9 {dimension_numbers = #tpu.dot_dimension_numbers<[1], [0], [0], [1], [0, 0, 1, 1], [], []>} : vector<16x256xbf16>, vector<256x128xbf16>, vector<16x128xf32> -> vector<16x128xf32>
    %c0_10 = arith.constant 0 : index
    %c0_11 = arith.constant 0 : index
    %9 = vector.load %arg7[%c0_10, %c0_11] : memref<1x128xf32, #tpu.memory_space<vmem>>, vector<1x128xf32>
    %10 = vector.broadcast %9 : vector<1x128xf32> to vector<16x128xf32>
    %11 = arith.addf %8, %10 : vector<16x128xf32>
    %cst_12 = arith.constant 5.000000e-01 : f32
    %12 = vector.broadcast %cst_12 : f32 to vector<16x128xf32>
    %13 = arith.mulf %12, %6 : vector<16x128xf32>
    %14 = math.tanh %13 : vector<16x128xf32>
    %cst_13 = arith.constant 1.000000e+00 : f32
    %15 = vector.broadcast %cst_13 : f32 to vector<16x128xf32>
    %16 = arith.addf %14, %15 : vector<16x128xf32>
    %cst_14 = arith.constant 5.000000e-01 : f32
    %17 = vector.broadcast %cst_14 : f32 to vector<16x128xf32>
    %18 = arith.mulf %17, %16 : vector<16x128xf32>
    %19 = math.tanh %11 : vector<16x128xf32>
    %20 = arith.subf %19, %1 : vector<16x128xf32>
    %21 = arith.mulf %18, %20 : vector<16x128xf32>
    %cst_15 = arith.constant 1.000000e-01 : f32
    %22 = vector.broadcast %cst_15 : f32 to vector<16x128xf32>
    %23 = arith.mulf %22, %21 : vector<16x128xf32>
    %24 = arith.addf %1, %23 : vector<16x128xf32>
    %c0_16 = arith.constant 0 : index
    %c0_17 = arith.constant 0 : index
    %25 = vector.load %arg8[%c0_16, %c0_17] : memref<16x128xf32, #tpu.memory_space<vmem>>, vector<16x128xf32>
    tpu.vector_store %arg8[%c0_16, %c0_17], %24 {strides = array<i32>} : memref<16x128xf32, #tpu.memory_space<vmem>>, vector<16x128xf32>,
    return
  }
  func.func @transform_0(%arg0: i32, %arg1: i32) -> (i32, i32) {
    %c0_i32 = arith.constant 0 : i32
    %c0_i32_0 = arith.constant 0 : i32
    return %arg0, %c0_i32 : i32, i32
  }
  func.func @transform_1(%arg0: i32, %arg1: i32) -> (i32, i32) {
    %c0_i32 = arith.constant 0 : i32
    return %arg0, %arg1 : i32, i32
  }
  func.func @transform_2(%arg0: i32, %arg1: i32) -> (i32, i32) {
    %c0_i32 = arith.constant 0 : i32
    %c0_i32_0 = arith.constant 0 : i32
    return %c0_i32, %arg1 : i32, i32
  }
  func.func @transform_3(%arg0: i32, %arg1: i32) -> (i32, i32) {
    %c0_i32 = arith.constant 0 : i32
    %c0_i32_0 = arith.constant 0 : i32
    return %c0_i32, %arg1 : i32, i32
  }
  func.func @transform_4(%arg0: i32, %arg1: i32) -> (i32, i32) {
    %c0_i32 = arith.constant 0 : i32
    %c0_i32_0 = arith.constant 0 : i32
    return %c0_i32, %arg1 : i32, i32
  }
  func.func @transform_5(%arg0: i32, %arg1: i32) -> (i32, i32) {
    %c0_i32 = arith.constant 0 : i32
    %c0_i32_0 = arith.constant 0 : i32
    return %c0_i32, %arg1 : i32, i32
  }
  func.func @transform_6(%arg0: i32, %arg1: i32) -> (i32, i32) {
    %c0_i32 = arith.constant 0 : i32
    return %arg0, %arg1 : i32, i32
  }
}

</mosaic_0001>

<llo_original>
// kernel: tpu_custom_call.1
$region0: #{tpu_custom_call.1}
  #allocation0 [shape = 'u32[]', space=smem, size = 0x4, offset = 0x4, fixed_abs, tag = 'smem constant byte address 0x4 - core index']
  #allocation1 [shape = 'u32[72,128]{1,0:T(1,128)}', space=vmem, size = 0x9000, scoped, tag = 'internal scratch']
  %s0 = inlined_call_operand.hbm [shape: bf16[16,256], index: 0, kind: input, shape index: {}]
  %s1 = inlined_call_operand.hbm [shape: f32[16,128], index: 1, kind: input, shape index: {}]
  %s2 = inlined_call_operand.hbm [shape: bf16[256,128], index: 2, kind: input, shape index: {}]
  %s3 = inlined_call_operand.hbm [shape: bf16[256,128], index: 3, kind: input, shape index: {}]
  %s4 = inlined_call_operand.vmem [shape: f32[1,128], index: 4, kind: input, shape index: {}]
  %s5 = inlined_call_operand.vmem [shape: f32[1,128], index: 5, kind: input, shape index: {}]
  %s6 = inlined_call_operand.hbm [shape: f32[16,128], index: 6, kind: output, shape index: {}]
  %s7 = sld [smem:[#allocation0]]
  $region50: #{tpu_custom_call.1} parent=0
    _
  %s9 = ssub.s32 1, %s7
  %s10 = scalar_select 0, %s9, %s7
  $region1: #{tpu_custom_call.1} parent=0
    #allocation2 [shape = 'u8[8192]{0}', space=vmem, size = 0x2000, scoped, tag = 'input window, operand 0, single buffered']
    #allocation3 [shape = 's32[1]{0}', space=sflag, size = 0x4, scoped, tag = 'scoped memory for tpu_custom_call.1']
    #allocation4 [shape = 's32[1]{0}', space=sflag, size = 0x4, scoped, tag = 'scoped memory for tpu_custom_call.1']
    #allocation5 [shape = 'u8[8192]{0}', space=vmem, size = 0x2000, scoped, tag = 'input window, operand 1, single buffered']
    #allocation6 [shape = 's32[1]{0}', space=sflag, size = 0x4, scoped, tag = 'scoped memory for tpu_custom_call.1']
    #allocation7 [shape = 'u8[65536]{0}', space=vmem, size = 0x10000, scoped, tag = 'input window, operand 2, single buffered']
    #allocation8 [shape = 'u8[65536]{0}', space=vmem, size = 0x10000, scoped, tag = 'input window, operand 3, single buffered']
    #allocation9 [shape = 's32[1]{0}', space=sflag, size = 0x4, scoped, tag = 'scoped memory for tpu_custom_call.1']
    #allocation10 [shape = 'u8[8192]{0}', space=vmem, size = 0x2000, scoped, tag = 'output window, operand 0, single buffered']
    %11 = vsyncpa [#allocation3], 0
    %12 = vsyncpa [#allocation6], 0
    %13 = vsyncpa [#allocation9], 0
    %14 = vsyncpa [#allocation4], 0
    // Predicated region
    $region2: #{tpu_custom_call.1} parent=1 // pred_check
      _
    $region3: #{tpu_custom_call.1} parent=1 // pred_check_branch
      %16 = sbr.rel (0) target = $region5
    $region4: #{tpu_custom_call.1} parent=1 // pred_region
      %18 = vsyncadd [#allocation3], 0
      %s19 = sshll.u32 %s0, 4
      %s20 = int_to_ptr.hbm [resolvable:$true] %s19
      %s21 = sshll.u32 [#allocation2], 4
      %s22 = int_to_ptr.vmem [resolvable:$true] %s21
      %27 = dma.hbm_to_vmem [thread:$0]  %s20, 256, %s22, [#allocation3], 128, 128, 8
    $region5: #{tpu_custom_call.1} parent=1 // pred_fallthru
      _
    // Predicated region
    $region6: #{tpu_custom_call.1} parent=1 // pred_check
      _
    $region7: #{tpu_custom_call.1} parent=1 // pred_check_branch
      %29 = sbr.rel (0) target = $region9
    $region8: #{tpu_custom_call.1} parent=1 // pred_region
      %31 = vsyncadd [#allocation6], 0
      %s32 = sshll.u32 %s1, 4
      %s33 = int_to_ptr.hbm [resolvable:$true] %s32
      %s34 = sshll.u32 [#allocation5], 4
      %s35 = int_to_ptr.vmem [resolvable:$true] %s34
      %40 = dma.hbm_to_vmem [thread:$0]  %s33, 256, %s35, [#allocation6], 128, 128, 8
    $region9: #{tpu_custom_call.1} parent=1 // pred_fallthru
      _
    // Predicated region
    $region10: #{tpu_custom_call.1} parent=1 // pred_check
      _
    $region11: #{tpu_custom_call.1} parent=1 // pred_check_branch
      %42 = sbr.rel (0) target = $region13
    $region12: #{tpu_custom_call.1} parent=1 // pred_region
      %44 = vsyncadd [#allocation6], 0
      %s45 = sshll.u32 %s2, 4
      %s46 = int_to_ptr.hbm [resolvable:$true] %s45
      %s47 = sshll.u32 [#allocation7], 4
      %s48 = int_to_ptr.vmem [resolvable:$true] %s47
      %53 = dma.hbm_to_vmem [thread:$0]  %s46, 2048, %s48, [#allocation6], 64, 64, 4
    $region13: #{tpu_custom_call.1} parent=1 // pred_fallthru
      _
    // Predicated region
    $region14: #{tpu_custom_call.1} parent=1 // pred_check
      _
    $region15: #{tpu_custom_call.1} parent=1 // pred_check_branch
      %55 = sbr.rel (0) target = $region17
    $region16: #{tpu_custom_call.1} parent=1 // pred_region
      %57 = vsyncadd [#allocation9], 0
      %s58 = sshll.u32 %s3, 4
      %s59 = int_to_ptr.hbm [resolvable:$true] %s58
      %s60 = sshll.u32 [#allocation8], 4
      %s61 = int_to_ptr.vmem [resolvable:$true] %s60
      %66 = dma.hbm_to_vmem [thread:$0]  %s59, 2048, %s61, [#allocation9], 64, 64, 4
    $region17: #{tpu_custom_call.1} parent=1 // pred_fallthru
      _
    // Predicated region
    $region18: #{tpu_custom_call.1} parent=1 // pred_check
      _
    $region19: #{tpu_custom_call.1} parent=1 // pred_check_branch
      %68 = sbr.rel (0) target = $region21
    $region20: #{tpu_custom_call.1} parent=1 // pred_region
      _
    $region21: #{tpu_custom_call.1} parent=1 // pred_fallthru
      _
    // Predicated region
    $region22: #{tpu_custom_call.1} parent=1 // pred_check
      _
    $region23: #{tpu_custom_call.1} parent=1 // pred_check_branch
      %70 = sbr.rel (0) target = $region25
    $region24: #{tpu_custom_call.1} parent=1 // pred_region
      _
    $region25: #{tpu_custom_call.1} parent=1 // pred_fallthru
      _
    // Predicated region
    $region26: #{tpu_custom_call.1} parent=1 // pred_check
      _
    $region27: #{tpu_custom_call.1} parent=1 // pred_check_branch
      %72 = sbr.rel (0) target = $region29
    $region28: #{tpu_custom_call.1} parent=1 // pred_region
      %74 = dma.done [#allocation3], 256
    $region29: #{tpu_custom_call.1} parent=1 // pred_fallthru
      _
    // Predicated region
    $region30: #{tpu_custom_call.1} parent=1 // pred_check
      _
    $region31: #{tpu_custom_call.1} parent=1 // pred_check_branch
      %76 = sbr.rel (0) target = $region33
    $region32: #{tpu_custom_call.1} parent=1 // pred_region
      %78 = dma.done [#allocation6], 256
    $region33: #{tpu_custom_call.1} parent=1 // pred_fallthru
      _
    // Predicated region
    $region34: #{tpu_custom_call.1} parent=1 // pred_check
      _
    $region35: #{tpu_custom_call.1} parent=1 // pred_check_branch
      %80 = sbr.rel (0) target = $region37
    $region36: #{tpu_custom_call.1} parent=1 // pred_region
      %82 = dma.done [#allocation6], 2048
    $region37: #{tpu_custom_call.1} parent=1 // pred_fallthru
      _
    // Predicated region
    $region38: #{tpu_custom_call.1} parent=1 // pred_check
      _
    $region39: #{tpu_custom_call.1} parent=1 // pred_check_branch
      %84 = sbr.rel (0) target = $region41
    $region40: #{tpu_custom_call.1} parent=1 // pred_region
      %86 = dma.done [#allocation9], 2048
    $region41: #{tpu_custom_call.1} parent=1 // pred_fallthru
      _
    %v87 = vld [vmem:[#allocation2] sm:$0xff]
    %v88 = vld [vmem:[#allocation2 + $0x8] sm:$0xff]
    %v89 = vld [vmem:[#allocation5] sm:$0xff]
    %v90 = vld [vmem:[#allocation5 + $0x8] sm:$0xff]
    %v91 = vld [vmem:[#allocation7] sm:$0xf]
    %v92 = vld [vmem:[#allocation7 + $0x4] sm:$0xf]
    %v93 = vld [vmem:[#allocation7 + $0x8] sm:$0xf]
    %v94 = vld [vmem:[#allocation7 + $0xc] sm:$0xf]
    %v95 = vld [vmem:[#allocation7 + $0x10] sm:$0xf]
    %v96 = vld [vmem:[#allocation7 + $0x14] sm:$0xf]
    %v97 = vld [vmem:[#allocation7 + $0x18] sm:$0xf]
    %v98 = vld [vmem:[#allocation7 + $0x1c] sm:$0xf]
    %v99 = vld [vmem:[#allocation7 + $0x20] sm:$0xf]
    %v100 = vld [vmem:[#allocation7 + $0x24] sm:$0xf]
    %v101 = vld [vmem:[#allocation7 + $0x28] sm:$0xf]
    %v102 = vld [vmem:[#allocation7 + $0x2c] sm:$0xf]
    %v103 = vld [vmem:[#allocation7 + $0x30] sm:$0xf]
    %v104 = vld [vmem:[#allocation7 + $0x34] sm:$0xf]
    %v105 = vld [vmem:[#allocation7 + $0x38] sm:$0xf]
    %v106 = vld [vmem:[#allocation7 + $0x3c] sm:$0xf]
    %v107 = vld [vmem:[#allocation7 + $0x40] sm:$0xf]
    %v108 = vld [vmem:[#allocation7 + $0x44] sm:$0xf]
    %v109 = vld [vmem:[#allocation7 + $0x48] sm:$0xf]
    %v110 = vld [vmem:[#allocation7 + $0x4c] sm:$0xf]
    %v111 = vld [vmem:[#allocation7 + $0x50] sm:$0xf]
    %v112 = vld [vmem:[#allocation7 + $0x54] sm:$0xf]
    %v113 = vld [vmem:[#allocation7 + $0x58] sm:$0xf]
    %v114 = vld [vmem:[#allocation7 + $0x5c] sm:$0xf]
    %v115 = vld [vmem:[#allocation7 + $0x60] sm:$0xf]
    %v116 = vld [vmem:[#allocation7 + $0x64] sm:$0xf]
    %v117 = vld [vmem:[#allocation7 + $0x68] sm:$0xf]
    %v118 = vld [vmem:[#allocation7 + $0x6c] sm:$0xf]
    %v119 = vld [vmem:[#allocation7 + $0x70] sm:$0xf]
    %v120 = vld [vmem:[#allocation7 + $0x74] sm:$0xf]
    %v121 = vld [vmem:[#allocation7 + $0x78] sm:$0xf]
    %v122 = vld [vmem:[#allocation7 + $0x7c] sm:$0xf]
    %v123 = vld [vmem:[%s4] sm:$0x1]
    %v125 = vperm.slane %v123, 0
    %v129 = vunpack.c.l.b16 %v87
    %v130 = vunpack.c.h.b16 %v87
    %v131 = vunpack.c.l.b16 %v88
    %v132 = vunpack.c.h.b16 %v88
    %v133 = vpack.c.b16 %v131, %v129
    %v134 = vpack.c.b16 %v132, %v130
    %v169 = vunpack.c.l.b16 %v91
    %v170 = vunpack.c.l.b16 %v92
    %v171 = vunpack.c.l.b16 %v93
    %v172 = vunpack.c.l.b16 %v94
    %v173 = vunpack.c.l.b16 %v95
    %v174 = vunpack.c.l.b16 %v96
    %v175 = vunpack.c.l.b16 %v97
    %v176 = vunpack.c.l.b16 %v98
    %v177 = vunpack.c.l.b16 %v99
    %v178 = vunpack.c.l.b16 %v100
    %v179 = vunpack.c.l.b16 %v101
    %v180 = vunpack.c.l.b16 %v102
    %v181 = vunpack.c.l.b16 %v103
    %v182 = vunpack.c.l.b16 %v104
    %v183 = vunpack.c.l.b16 %v105
    %v184 = vunpack.c.l.b16 %v106
    %v185 = vunpack.c.l.b16 %v107
    %v186 = vunpack.c.l.b16 %v108
    %v187 = vunpack.c.l.b16 %v109
    %v188 = vunpack.c.l.b16 %v110
    %v189 = vunpack.c.l.b16 %v111
    %v190 = vunpack.c.l.b16 %v112
    %v191 = vunpack.c.l.b16 %v113
    %v192 = vunpack.c.l.b16 %v114
    %v193 = vunpack.c.l.b16 %v115
    %v194 = vunpack.c.l.b16 %v116
    %v195 = vunpack.c.l.b16 %v117
    %v196 = vunpack.c.l.b16 %v118
    %v197 = vunpack.c.l.b16 %v119
    %v198 = vunpack.c.l.b16 %v120
    %v199 = vunpack.c.l.b16 %v121
    %v200 = vunpack.c.l.b16 %v122
    %v201 = vpack.c.b16 %v170, %v169
    %v202 = vpack.c.b16 %v172, %v171
    %v203 = vpack.c.b16 %v174, %v173
    %v204 = vpack.c.b16 %v176, %v175
    %v205 = vpack.c.b16 %v178, %v177
    %v206 = vpack.c.b16 %v180, %v179
    %v207 = vpack.c.b16 %v182, %v181
    %v208 = vpack.c.b16 %v184, %v183
    %v209 = vpack.c.b16 %v186, %v185
    %v210 = vpack.c.b16 %v188, %v187
    %v211 = vpack.c.b16 %v190, %v189
    %v212 = vpack.c.b16 %v192, %v191
    %v213 = vpack.c.b16 %v194, %v193
    %v214 = vpack.c.b16 %v196, %v195
    %v215 = vpack.c.b16 %v198, %v197
    %v216 = vpack.c.b16 %v200, %v199
    %233 = vmatpush.bf16.msra.mxu0 %v208
    %234 = vmatpush.bf16.msra.mxu0 %v207
    %235 = vmatpush.bf16.msra.mxu0 %v206
    %236 = vmatpush.bf16.msra.mxu0 %v205
    %237 = vmatpush.bf16.msra.mxu0 %v204
    %238 = vmatpush.bf16.msra.mxu0 %v203
    %239 = vmatpush.bf16.msra.mxu0 %v202
    %240 = vmatpush.bf16.msra.mxu0 %v201
    %241 = vmatmul.bf16.gmra.mxu0 %v133
    %v242 = vpop.f32.mrf.mxu0
    %v243 = vadd.f32 %v125, %v242
    %v244 = vpop.f32.mrf.mxu0
    %v245 = vadd.f32 %v125, %v244
    %246 = vdwg.mxu0
    %247 = vmatpush.bf16.msra.mxu0 %v216
    %248 = vmatpush.bf16.msra.mxu0 %v215
    %249 = vmatpush.bf16.msra.mxu0 %v214
    %250 = vmatpush.bf16.msra.mxu0 %v213
    %251 = vmatpush.bf16.msra.mxu0 %v212
    %252 = vmatpush.bf16.msra.mxu0 %v211
    %253 = vmatpush.bf16.msra.mxu0 %v210
    %254 = vmatpush.bf16.msra.mxu0 %v209
    %255 = vmatmul.bf16.gmra.mxu0 %v134
    %v256 = vpop.f32.mrf.mxu0
    %v257 = vadd.f32 %v243, %v256
    %v258 = vpop.f32.mrf.mxu0
    %v259 = vadd.f32 %v245, %v258
    %260 = vdwg.mxu0
    %v261 = vld [vmem:[#allocation8] sm:$0xf]
    %v262 = vld [vmem:[#allocation8 + $0x4] sm:$0xf]
    %v263 = vld [vmem:[#allocation8 + $0x8] sm:$0xf]
    %v264 = vld [vmem:[#allocation8 + $0xc] sm:$0xf]
    %v265 = vld [vmem:[#allocation8 + $0x10] sm:$0xf]
    %v266 = vld [vmem:[#allocation8 + $0x14] sm:$0xf]
    %v267 = vld [vmem:[#allocation8 + $0x18] sm:$0xf]
    %v268 = vld [vmem:[#allocation8 + $0x1c] sm:$0xf]
    %v269 = vld [vmem:[#allocation8 + $0x20] sm:$0xf]
    %v270 = vld [vmem:[#allocation8 + $0x24] sm:$0xf]
    %v271 = vld [vmem:[#allocation8 + $0x28] sm:$0xf]
    %v272 = vld [vmem:[#allocation8 + $0x2c] sm:$0xf]
    %v273 = vld [vmem:[#allocation8 + $0x30] sm:$0xf]
    %v274 = vld [vmem:[#allocation8 + $0x34] sm:$0xf]
    %v275 = vld [vmem:[#allocation8 + $0x38] sm:$0xf]
    %v276 = vld [vmem:[#allocation8 + $0x3c] sm:$0xf]
    %v277 = vld [vmem:[#allocation8 + $0x40] sm:$0xf]
    %v278 = vld [vmem:[#allocation8 + $0x44] sm:$0xf]
    %v279 = vld [vmem:[#allocation8 + $0x48] sm:$0xf]
    %v280 = vld [vmem:[#allocation8 + $0x4c] sm:$0xf]
    %v281 = vld [vmem:[#allocation8 + $0x50] sm:$0xf]
    %v282 = vld [vmem:[#allocation8 + $0x54] sm:$0xf]
    %v283 = vld [vmem:[#allocation8 + $0x58] sm:$0xf]
    %v284 = vld [vmem:[#allocation8 + $0x5c] sm:$0xf]
    %v285 = vld [vmem:[#allocation8 + $0x60] sm:$0xf]
    %v286 = vld [vmem:[#allocation8 + $0x64] sm:$0xf]
    %v287 = vld [vmem:[#allocation8 + $0x68] sm:$0xf]
    %v288 = vld [vmem:[#allocation8 + $0x6c] sm:$0xf]
    %v289 = vld [vmem:[#allocation8 + $0x70] sm:$0xf]
    %v290 = vld [vmem:[#allocation8 + $0x74] sm:$0xf]
    %v291 = vld [vmem:[#allocation8 + $0x78] sm:$0xf]
    %v292 = vld [vmem:[#allocation8 + $0x7c] sm:$0xf]
    %v293 = vld [vmem:[%s5] sm:$0x1]
    %v295 = vperm.slane %v293, 0
    %v329 = vunpack.c.l.b16 %v261
    %v330 = vunpack.c.l.b16 %v262
    %v331 = vunpack.c.l.b16 %v263
    %v332 = vunpack.c.l.b16 %v264
    %v333 = vunpack.c.l.b16 %v265
    %v334 = vunpack.c.l.b16 %v266
    %v335 = vunpack.c.l.b16 %v267
    %v336 = vunpack.c.l.b16 %v268
    %v337 = vunpack.c.l.b16 %v269
    %v338 = vunpack.c.l.b16 %v270
    %v339 = vunpack.c.l.b16 %v271
    %v340 = vunpack.c.l.b16 %v272
    %v341 = vunpack.c.l.b16 %v273
    %v342 = vunpack.c.l.b16 %v274
    %v343 = vunpack.c.l.b16 %v275
    %v344 = vunpack.c.l.b16 %v276
    %v345 = vunpack.c.l.b16 %v277
    %v346 = vunpack.c.l.b16 %v278
    %v347 = vunpack.c.l.b16 %v279
    %v348 = vunpack.c.l.b16 %v280
    %v349 = vunpack.c.l.b16 %v281
    %v350 = vunpack.c.l.b16 %v282
    %v351 = vunpack.c.l.b16 %v283
    %v352 = vunpack.c.l.b16 %v284
    %v353 = vunpack.c.l.b16 %v285
    %v354 = vunpack.c.l.b16 %v286
    %v355 = vunpack.c.l.b16 %v287
    %v356 = vunpack.c.l.b16 %v288
    %v357 = vunpack.c.l.b16 %v289
    %v358 = vunpack.c.l.b16 %v290
    %v359 = vunpack.c.l.b16 %v291
    %v360 = vunpack.c.l.b16 %v292
    %v361 = vpack.c.b16 %v330, %v329
    %v362 = vpack.c.b16 %v332, %v331
    %v363 = vpack.c.b16 %v334, %v333
    %v364 = vpack.c.b16 %v336, %v335
    %v365 = vpack.c.b16 %v338, %v337
    %v366 = vpack.c.b16 %v340, %v339
    %v367 = vpack.c.b16 %v342, %v341
    %v368 = vpack.c.b16 %v344, %v343
    %v369 = vpack.c.b16 %v346, %v345
    %v370 = vpack.c.b16 %v348, %v347
    %v371 = vpack.c.b16 %v350, %v349
    %v372 = vpack.c.b16 %v352, %v351
    %v373 = vpack.c.b16 %v354, %v353
    %v374 = vpack.c.b16 %v356, %v355
    %v375 = vpack.c.b16 %v358, %v357
    %v376 = vpack.c.b16 %v360, %v359
    %393 = vmatpush.bf16.msra.mxu0 %v368
    %394 = vmatpush.bf16.msra.mxu0 %v367
    %395 = vmatpush.bf16.msra.mxu0 %v366
    %396 = vmatpush.bf16.msra.mxu0 %v365
    %397 = vmatpush.bf16.msra.mxu0 %v364
    %398 = vmatpush.bf16.msra.mxu0 %v363
    %399 = vmatpush.bf16.msra.mxu0 %v362
    %400 = vmatpush.bf16.msra.mxu0 %v361
    %401 = vmatmul.bf16.gmra.mxu0 %v133
    %v402 = vpop.f32.mrf.mxu0
    %v403 = vadd.f32 %v295, %v402
    %v404 = vpop.f32.mrf.mxu0
    %v405 = vadd.f32 %v295, %v404
    %406 = vdwg.mxu0
    %407 = vmatpush.bf16.msra.mxu0 %v376
    %408 = vmatpush.bf16.msra.mxu0 %v375
    %409 = vmatpush.bf16.msra.mxu0 %v374
    %410 = vmatpush.bf16.msra.mxu0 %v373
    %411 = vmatpush.bf16.msra.mxu0 %v372
    %412 = vmatpush.bf16.msra.mxu0 %v371
    %413 = vmatpush.bf16.msra.mxu0 %v370
    %414 = vmatpush.bf16.msra.mxu0 %v369
    %415 = vmatmul.bf16.gmra.mxu0 %v134
    %v416 = vpop.f32.mrf.mxu0
    %v417 = vadd.f32 %v403, %v416
    %v418 = vpop.f32.mrf.mxu0
    %v419 = vadd.f32 %v405, %v418
    %420 = vdwg.mxu0
    %v421 = vmul.f32 %v257, 0.5
    %v422 = vmul.f32 %v259, 0.5
    %v423 = vtanh.pop %v421
    %v424 = vtanh.pop %v422
    %v425 = vadd.f32 %v423, 1.0
    %v426 = vadd.f32 %v424, 1.0
    %v427 = vmul.f32 %v425, 0.5
    %v428 = vmul.f32 %v426, 0.5
    %v429 = vtanh.pop %v417
    %v430 = vtanh.pop %v419
    %v431 = vsub.f32 %v429, %v89
    %v432 = vsub.f32 %v430, %v90
    %v433 = vmul.f32 %v427, %v431
    %v434 = vmul.f32 %v428, %v432
    %v435 = vmul.f32 %v433, 0.1
    %v436 = vmul.f32 %v434, 0.1
    %v437 = vadd.f32 %v89, %v435
    %v438 = vadd.f32 %v90, %v436
    %439 = vst [vmem:[#allocation10] sm:$0xff] %v437
    %440 = vst [vmem:[#allocation10 + $0x8] sm:$0xff] %v438
    // Predicated region
    $region42: #{tpu_custom_call.1} parent=1 // pred_check
      _
    $region43: #{tpu_custom_call.1} parent=1 // pred_check_branch
      %442 = sbr.rel (0) target = $region45
    $region44: #{tpu_custom_call.1} parent=1 // pred_region
      %444 = vsyncadd [#allocation4], 0
      %s445 = sshll.u32 [#allocation10], 4
      %s446 = int_to_ptr.vmem [resolvable:$true] %s445
      %s447 = sshll.u32 %s6, 4
      %s448 = int_to_ptr.hbm [resolvable:$true] %s447
      %453 = dma.vmem_to_hbm [thread:$0]  %s446, 256, %s448, [#allocation4], 128, 128, 8
    $region45: #{tpu_custom_call.1} parent=1 // pred_fallthru
      _
    // Predicated region
    $region46: #{tpu_custom_call.1} parent=1 // pred_check
      _
    $region47: #{tpu_custom_call.1} parent=1 // pred_check_branch
      %455 = sbr.rel (0) target = $region49
    $region48: #{tpu_custom_call.1} parent=1 // pred_region
      %457 = dma.done [#allocation4], 256
    $region49: #{tpu_custom_call.1} parent=1 // pred_fallthru
      _
    %458 = vsyncpa [#allocation3], 1
    %459 = vsyncpa [#allocation6], 1
    %460 = vsyncpa [#allocation9], 1
    %461 = vsyncpa [#allocation4], 1

// kernel: tpu_custom_call.1
$region0: #{tpu_custom_call.1}
  #allocation0 [shape = 'u32[]', space=smem, size = 0x4, offset = 0x4, fixed_abs, tag = 'smem constant byte address 0x4 - core index']
  #allocation1 [shape = 'u32[72,128]{1,0:T(1,128)}', space=vmem, size = 0x9000, scoped, tag = 'internal scratch']
  %s0 = inlined_call_operand.hbm [shape: bf16[16,256], index: 0, kind: input, shape index: {}]
  %s1 = inlined_call_operand.hbm [shape: f32[16,128], index: 1, kind: input, shape index: {}]
  %s2 = inlined_call_operand.hbm [shape: bf16[256,128], index: 2, kind: input, shape index: {}]
  %s3 = inlined_call_operand.hbm [shape: bf16[256,128], index: 3, kind: input, shape index: {}]
  %s4 = inlined_call_operand.vmem [shape: f32[1,128], index: 4, kind: input, shape index: {}]
  %s5 = inlined_call_operand.vmem [shape: f32[1,128], index: 5, kind: input, shape index: {}]
  %s6 = inlined_call_operand.hbm [shape: f32[16,128], index: 6, kind: output, shape index: {}]
  %s7 = sld [smem:[#allocation0]]
  $region50: #{tpu_custom_call.1} parent=0
    _
  %s9 = ssub.s32 1, %s7
  %s10 = scalar_select 0, %s9, %s7
  $region1: #{tpu_custom_call.1} parent=0
    #allocation2 [shape = 'u8[8192]{0}', space=vmem, size = 0x2000, scoped, tag = 'input window, operand 0, single buffered']
    #allocation3 [shape = 's32[1]{0}', space=sflag, size = 0x4, scoped, tag = 'scoped memory for tpu_custom_call.1']
    #allocation4 [shape = 's32[1]{0}', space=sflag, size = 0x4, scoped, tag = 'scoped memory for tpu_custom_call.1']
    #allocation5 [shape = 'u8[8192]{0}', space=vmem, size = 0x2000, scoped, tag = 'input window, operand 1, single buffered']
    #allocation6 [shape = 's32[1]{0}', space=sflag, size = 0x4, scoped, tag = 'scoped memory for tpu_custom_call.1']
    #allocation7 [shape = 'u8[65536]{0}', space=vmem, size = 0x10000, scoped, tag = 'input window, operand 2, single buffered']
    #allocation8 [shape = 'u8[65536]{0}', space=vmem, size = 0x10000, scoped, tag = 'input window, operand 3, single buffered']
    #allocation9 [shape = 's32[1]{0}', space=sflag, size = 0x4, scoped, tag = 'scoped memory for tpu_custom_call.1']
    #allocation10 [shape = 'u8[8192]{0}', space=vmem, size = 0x2000, scoped, tag = 'output window, operand 0, single buffered']
    %11 = vsyncpa [#allocation3], 0
    %12 = vsyncpa [#allocation6], 0
    %13 = vsyncpa [#allocation9], 0
    %14 = vsyncpa [#allocation4], 0
    // Predicated region
    $region2: #{tpu_custom_call.1} parent=1 // pred_check
      _
    $region3: #{tpu_custom_call.1} parent=1 // pred_check_branch
      %16 = sbr.rel (0) target = $region5
    $region4: #{tpu_custom_call.1} parent=1 // pred_region
      %18 = vsyncadd [#allocation3], 0
      %s19 = sshll.u32 %s0, 4
      %s20 = int_to_ptr.hbm [resolvable:$true] %s19
      %s21 = sshll.u32 [#allocation2], 4
      %s22 = int_to_ptr.vmem [resolvable:$true] %s21
      %27 = dma.hbm_to_vmem [thread:$0]  %s20, 256, %s22, [#allocation3], 128, 128, 8
    $region5: #{tpu_custom_call.1} parent=1 // pred_fallthru
      _
    // Predicated region
    $region6: #{tpu_custom_call.1} parent=1 // pred_check
      _
    $region7: #{tpu_custom_call.1} parent=1 // pred_check_branch
      %29 = sbr.rel (0) target = $region9
    $region8: #{tpu_custom_call.1} parent=1 // pred_region
      %31 = vsyncadd [#allocation6], 0
      %s32 = sshll.u32 %s1, 4
      %s33 = int_to_ptr.hbm [resolvable:$true] %s32
      %s34 = sshll.u32 [#allocation5], 4
      %s35 = int_to_ptr.vmem [resolvable:$true] %s34
      %40 = dma.hbm_to_vmem [thread:$0]  %s33, 256, %s35, [#allocation6], 128, 128, 8
    $region9: #{tpu_custom_call.1} parent=1 // pred_fallthru
      _
    // Predicated region
    $region10: #{tpu_custom_call.1} parent=1 // pred_check
      _
    $region11: #{tpu_custom_call.1} parent=1 // pred_check_branch
      %42 = sbr.rel (0) target = $region13
    $region12: #{tpu_custom_call.1} parent=1 // pred_region
      %44 = vsyncadd [#allocation6], 0
      %s45 = sshll.u32 %s2, 4
      %s46 = int_to_ptr.hbm [resolvable:$true] %s45
      %s47 = sshll.u32 [#allocation7], 4
      %s48 = int_to_ptr.vmem [resolvable:$true] %s47
      %53 = dma.hbm_to_vmem [thread:$0]  %s46, 2048, %s48, [#allocation6], 64, 64, 4
    $region13: #{tpu_custom_call.1} parent=1 // pred_fallthru
      _
    // Predicated region
    $region14: #{tpu_custom_call.1} parent=1 // pred_check
      _
    $region15: #{tpu_custom_call.1} parent=1 // pred_check_branch
      %55 = sbr.rel (0) target = $region17
    $region16: #{tpu_custom_call.1} parent=1 // pred_region
      %57 = vsyncadd [#allocation9], 0
      %s58 = sshll.u32 %s3, 4
      %s59 = int_to_ptr.hbm [resolvable:$true] %s58
      %s60 = sshll.u32 [#allocation8], 4
      %s61 = int_to_ptr.vmem [resolvable:$true] %s60
      %66 = dma.hbm_to_vmem [thread:$0]  %s59, 2048, %s61, [#allocation9], 64, 64, 4
    $region17: #{tpu_custom_call.1} parent=1 // pred_fallthru
      _
    // Predicated region
    $region18: #{tpu_custom_call.1} parent=1 // pred_check
      _
    $region19: #{tpu_custom_call.1} parent=1 // pred_check_branch
      %68 = sbr.rel (0) target = $region21
    $region20: #{tpu_custom_call.1} parent=1 // pred_region
      _
    $region21: #{tpu_custom_call.1} parent=1 // pred_fallthru
      _
    // Predicated region
    $region22: #{tpu_custom_call.1} parent=1 // pred_check
      _
    $region23: #{tpu_custom_call.1} parent=1 // pred_check_branch
      %70 = sbr.rel (0) target = $region25
    $region24: #{tpu_custom_call.1} parent=1 // pred_region
      _
    $region25: #{tpu_custom_call.1} parent=1 // pred_fallthru
      _
    // Predicated region
    $region26: #{tpu_custom_call.1} parent=1 // pred_check
      _
    $region27: #{tpu_custom_call.1} parent=1 // pred_check_branch
      %72 = sbr.rel (0) target = $region29
    $region28: #{tpu_custom_call.1} parent=1 // pred_region
      %74 = dma.done [#allocation3], 256
    $region29: #{tpu_custom_call.1} parent=1 // pred_fallthru
      _
    // Predicated region
    $region30: #{tpu_custom_call.1} parent=1 // pred_check
      _
    $region31: #{tpu_custom_call.1} parent=1 // pred_check_branch
      %76 = sbr.rel (0) target = $region33
    $region32: #{tpu_custom_call.1} parent=1 // pred_region
      %78 = dma.done [#allocation6], 256
    $region33: #{tpu_custom_call.1} parent=1 // pred_fallthru
      _
    // Predicated region
    $region34: #{tpu_custom_call.1} parent=1 // pred_check
      _
    $region35: #{tpu_custom_call.1} parent=1 // pred_check_branch
      %80 = sbr.rel (0) target = $region37
    $region36: #{tpu_custom_call.1} parent=1 // pred_region
      %82 = dma.done [#allocation6], 2048
    $region37: #{tpu_custom_call.1} parent=1 // pred_fallthru
      _
    // Predicated region
    $region38: #{tpu_custom_call.1} parent=1 // pred_check
      _
    $region39: #{tpu_custom_call.1} parent=1 // pred_check_branch
      %84 = sbr.rel (0) target = $region41
    $region40: #{tpu_custom_call.1} parent=1 // pred_region
      %86 = dma.done [#allocation9], 2048
    $region41: #{tpu_custom_call.1} parent=1 // pred_fallthru
      _
    %v87 = vld [vmem:[#allocation2] sm:$0xff]
    %v88 = vld [vmem:[#allocation2 + $0x8] sm:$0xff]
    %v89 = vld [vmem:[#allocation5] sm:$0xff]
    %v90 = vld [vmem:[#allocation5 + $0x8] sm:$0xff]
    %v91 = vld [vmem:[#allocation7] sm:$0xf]
    %v92 = vld [vmem:[#allocation7 + $0x4] sm:$0xf]
    %v93 = vld [vmem:[#allocation7 + $0x8] sm:$0xf]
    %v94 = vld [vmem:[#allocation7 + $0xc] sm:$0xf]
    %v95 = vld [vmem:[#allocation7 + $0x10] sm:$0xf]
    %v96 = vld [vmem:[#allocation7 + $0x14] sm:$0xf]
    %v97 = vld [vmem:[#allocation7 + $0x18] sm:$0xf]
    %v98 = vld [vmem:[#allocation7 + $0x1c] sm:$0xf]
    %v99 = vld [vmem:[#allocation7 + $0x20] sm:$0xf]
    %v100 = vld [vmem:[#allocation7 + $0x24] sm:$0xf]
    %v101 = vld [vmem:[#allocation7 + $0x28] sm:$0xf]
    %v102 = vld [vmem:[#allocation7 + $0x2c] sm:$0xf]
    %v103 = vld [vmem:[#allocation7 + $0x30] sm:$0xf]
    %v104 = vld [vmem:[#allocation7 + $0x34] sm:$0xf]
    %v105 = vld [vmem:[#allocation7 + $0x38] sm:$0xf]
    %v106 = vld [vmem:[#allocation7 + $0x3c] sm:$0xf]
    %v107 = vld [vmem:[#allocation7 + $0x40] sm:$0xf]
    %v108 = vld [vmem:[#allocation7 + $0x44] sm:$0xf]
    %v109 = vld [vmem:[#allocation7 + $0x48] sm:$0xf]
    %v110 = vld [vmem:[#allocation7 + $0x4c] sm:$0xf]
    %v111 = vld [vmem:[#allocation7 + $0x50] sm:$0xf]
    %v112 = vld [vmem:[#allocation7 + $0x54] sm:$0xf]
    %v113 = vld [vmem:[#allocation7 + $0x58] sm:$0xf]
    %v114 = vld [vmem:[#allocation7 + $0x5c] sm:$0xf]
    %v115 = vld [vmem:[#allocation7 + $0x60] sm:$0xf]
    %v116 = vld [vmem:[#allocation7 + $0x64] sm:$0xf]
    %v117 = vld [vmem:[#allocation7 + $0x68] sm:$0xf]
    %v118 = vld [vmem:[#allocation7 + $0x6c] sm:$0xf]
    %v119 = vld [vmem:[#allocation7 + $0x70] sm:$0xf]
    %v120 = vld [vmem:[#allocation7 + $0x74] sm:$0xf]
    %v121 = vld [vmem:[#allocation7 + $0x78] sm:$0xf]
    %v122 = vld [vmem:[#allocation7 + $0x7c] sm:$0xf]
    %v123 = vld [vmem:[%s4] sm:$0x1]
    %v125 = vperm.slane %v123, 0
    %v129 = vunpack.c.l.b16 %v87
    %v130 = vunpack.c.h.b16 %v87
    %v131 = vunpack.c.l.b16 %v88
    %v132 = vunpack.c.h.b16 %v88
    %v133 = vpack.c.b16 %v131, %v129
    %v134 = vpack.c.b16 %v132, %v130
    %v169 = vunpack.c.l.b16 %v91
    %v170 = vunpack.c.l.b16 %v92
    %v171 = vunpack.c.l.b16 %v93
    %v172 = vunpack.c.l.b16 %v94
    %v173 = vunpack.c.l.b16 %v95
    %v174 = vunpack.c.l.b16 %v96
    %v175 = vunpack.c.l.b16 %v97
    %v176 = vunpack.c.l.b16 %v98
    %v177 = vunpack.c.l.b16 %v99
    %v178 = vunpack.c.l.b16 %v100
    %v179 = vunpack.c.l.b16 %v101
    %v180 = vunpack.c.l.b16 %v102
    %v181 = vunpack.c.l.b16 %v103
    %v182 = vunpack.c.l.b16 %v104
    %v183 = vunpack.c.l.b16 %v105
    %v184 = vunpack.c.l.b16 %v106
    %v185 = vunpack.c.l.b16 %v107
    %v186 = vunpack.c.l.b16 %v108
    %v187 = vunpack.c.l.b16 %v109
    %v188 = vunpack.c.l.b16 %v110
    %v189 = vunpack.c.l.b16 %v111
    %v190 = vunpack.c.l.b16 %v112
    %v191 = vunpack.c.l.b16 %v113
    %v192 = vunpack.c.l.b16 %v114
    %v193 = vunpack.c.l.b16 %v115
    %v194 = vunpack.c.l.b16 %v116
    %v195 = vunpack.c.l.b16 %v117
    %v196 = vunpack.c.l.b16 %v118
    %v197 = vunpack.c.l.b16 %v119
    %v198 = vunpack.c.l.b16 %v120
    %v199 = vunpack.c.l.b16 %v121
    %v200 = vunpack.c.l.b16 %v122
    %v201 = vpack.c.b16 %v170, %v169
    %v202 = vpack.c.b16 %v172, %v171
    %v203 = vpack.c.b16 %v174, %v173
    %v204 = vpack.c.b16 %v176, %v175
    %v205 = vpack.c.b16 %v178, %v177
    %v206 = vpack.c.b16 %v180, %v179
    %v207 = vpack.c.b16 %v182, %v181
    %v208 = vpack.c.b16 %v184, %v183
    %v209 = vpack.c.b16 %v186, %v185
    %v210 = vpack.c.b16 %v188, %v187
    %v211 = vpack.c.b16 %v190, %v189
    %v212 = vpack.c.b16 %v192, %v191
    %v213 = vpack.c.b16 %v194, %v193
    %v214 = vpack.c.b16 %v196, %v195
    %v215 = vpack.c.b16 %v198, %v197
    %v216 = vpack.c.b16 %v200, %v199
    %233 = vmatpush.bf16.msra.mxu0 %v208
    %234 = vmatpush.bf16.msra.mxu0 %v207
    %235 = vmatpush.bf16.msra.mxu0 %v206
    %236 = vmatpush.bf16.msra.mxu0 %v205
    %237 = vmatpush.bf16.msra.mxu0 %v204
    %238 = vmatpush.bf16.msra.mxu0 %v203
    %239 = vmatpush.bf16.msra.mxu0 %v202
    %240 = vmatpush.bf16.msra.mxu0 %v201
    %241 = vmatmul.bf16.gmra.mxu0 %v133
    %v242 = vpop.f32.mrf.mxu0
    %v243 = vadd.f32 %v125, %v242
    %v244 = vpop.f32.mrf.mxu0
    %v245 = vadd.f32 %v125, %v244
    %246 = vdwg.mxu0
    %247 = vmatpush.bf16.msra.mxu0 %v216
    %248 = vmatpush.bf16.msra.mxu0 %v215
    %249 = vmatpush.bf16.msra.mxu0 %v214
    %250 = vmatpush.bf16.msra.mxu0 %v213
    %251 = vmatpush.bf16.msra.mxu0 %v212
    %252 = vmatpush.bf16.msra.mxu0 %v211
    %253 = vmatpush.bf16.msra.mxu0 %v210
    %254 = vmatpush.bf16.msra.mxu0 %v209
    %255 = vmatmul.bf16.gmra.mxu0 %v134
    %v256 = vpop.f32.mrf.mxu0
    %v257 = vadd.f32 %v243, %v256
    %v258 = vpop.f32.mrf.mxu0
    %v259 = vadd.f32 %v245, %v258
    %260 = vdwg.mxu0
    %v261 = vld [vmem:[#allocation8] sm:$0xf]
    %v262 = vld [vmem:[#allocation8 + $0x4] sm:$0xf]
    %v263 = vld [vmem:[#allocation8 + $0x8] sm:$0xf]
    %v264 = vld [vmem:[#allocation8 + $0xc] sm:$0xf]
    %v265 = vld [vmem:[#allocation8 + $0x10] sm:$0xf]
    %v266 = vld [vmem:[#allocation8 + $0x14] sm:$0xf]
    %v267 = vld [vmem:[#allocation8 + $0x18] sm:$0xf]
    %v268 = vld [vmem:[#allocation8 + $0x1c] sm:$0xf]
    %v269 = vld [vmem:[#allocation8 + $0x20] sm:$0xf]
    %v270 = vld [vmem:[#allocation8 + $0x24] sm:$0xf]
    %v271 = vld [vmem:[#allocation8 + $0x28] sm:$0xf]
    %v272 = vld [vmem:[#allocation8 + $0x2c] sm:$0xf]
    %v273 = vld [vmem:[#allocation8 + $0x30] sm:$0xf]
    %v274 = vld [vmem:[#allocation8 + $0x34] sm:$0xf]
    %v275 = vld [vmem:[#allocation8 + $0x38] sm:$0xf]
    %v276 = vld [vmem:[#allocation8 + $0x3c] sm:$0xf]
    %v277 = vld [vmem:[#allocation8 + $0x40] sm:$0xf]
    %v278 = vld [vmem:[#allocation8 + $0x44] sm:$0xf]
    %v279 = vld [vmem:[#allocation8 + $0x48] sm:$0xf]
    %v280 = vld [vmem:[#allocation8 + $0x4c] sm:$0xf]
    %v281 = vld [vmem:[#allocation8 + $0x50] sm:$0xf]
    %v282 = vld [vmem:[#allocation8 + $0x54] sm:$0xf]
    %v283 = vld [vmem:[#allocation8 + $0x58] sm:$0xf]
    %v284 = vld [vmem:[#allocation8 + $0x5c] sm:$0xf]
    %v285 = vld [vmem:[#allocation8 + $0x60] sm:$0xf]
    %v286 = vld [vmem:[#allocation8 + $0x64] sm:$0xf]
    %v287 = vld [vmem:[#allocation8 + $0x68] sm:$0xf]
    %v288 = vld [vmem:[#allocation8 + $0x6c] sm:$0xf]
    %v289 = vld [vmem:[#allocation8 + $0x70] sm:$0xf]
    %v290 = vld [vmem:[#allocation8 + $0x74] sm:$0xf]
    %v291 = vld [vmem:[#allocation8 + $0x78] sm:$0xf]
    %v292 = vld [vmem:[#allocation8 + $0x7c] sm:$0xf]
    %v293 = vld [vmem:[%s5] sm:$0x1]
    %v295 = vperm.slane %v293, 0
    %v329 = vunpack.c.l.b16 %v261
    %v330 = vunpack.c.l.b16 %v262
    %v331 = vunpack.c.l.b16 %v263
    %v332 = vunpack.c.l.b16 %v264
    %v333 = vunpack.c.l.b16 %v265
    %v334 = vunpack.c.l.b16 %v266
    %v335 = vunpack.c.l.b16 %v267
    %v336 = vunpack.c.l.b16 %v268
    %v337 = vunpack.c.l.b16 %v269
    %v338 = vunpack.c.l.b16 %v270
    %v339 = vunpack.c.l.b16 %v271
    %v340 = vunpack.c.l.b16 %v272
    %v341 = vunpack.c.l.b16 %v273
    %v342 = vunpack.c.l.b16 %v274
    %v343 = vunpack.c.l.b16 %v275
    %v344 = vunpack.c.l.b16 %v276
    %v345 = vunpack.c.l.b16 %v277
    %v346 = vunpack.c.l.b16 %v278
    %v347 = vunpack.c.l.b16 %v279
    %v348 = vunpack.c.l.b16 %v280
    %v349 = vunpack.c.l.b16 %v281
    %v350 = vunpack.c.l.b16 %v282
    %v351 = vunpack.c.l.b16 %v283
    %v352 = vunpack.c.l.b16 %v284
    %v353 = vunpack.c.l.b16 %v285
    %v354 = vunpack.c.l.b16 %v286
    %v355 = vunpack.c.l.b16 %v287
    %v356 = vunpack.c.l.b16 %v288
    %v357 = vunpack.c.l.b16 %v289
    %v358 = vunpack.c.l.b16 %v290
    %v359 = vunpack.c.l.b16 %v291
    %v360 = vunpack.c.l.b16 %v292
    %v361 = vpack.c.b16 %v330, %v329
    %v362 = vpack.c.b16 %v332, %v331
    %v363 = vpack.c.b16 %v334, %v333
    %v364 = vpack.c.b16 %v336, %v335
    %v365 = vpack.c.b16 %v338, %v337
    %v366 = vpack.c.b16 %v340, %v339
    %v367 = vpack.c.b16 %v342, %v341
    %v368 = vpack.c.b16 %v344, %v343
    %v369 = vpack.c.b16 %v346, %v345
    %v370 = vpack.c.b16 %v348, %v347
    %v371 = vpack.c.b16 %v350, %v349
    %v372 = vpack.c.b16 %v352, %v351
    %v373 = vpack.c.b16 %v354, %v353
    %v374 = vpack.c.b16 %v356, %v355
    %v375 = vpack.c.b16 %v358, %v357
    %v376 = vpack.c.b16 %v360, %v359
    %393 = vmatpush.bf16.msra.mxu0 %v368
    %394 = vmatpush.bf16.msra.mxu0 %v367
    %395 = vmatpush.bf16.msra.mxu0 %v366
    %396 = vmatpush.bf16.msra.mxu0 %v365
    %397 = vmatpush.bf16.msra.mxu0 %v364
    %398 = vmatpush.bf16.msra.mxu0 %v363
    %399 = vmatpush.bf16.msra.mxu0 %v362
    %400 = vmatpush.bf16.msra.mxu0 %v361
    %401 = vmatmul.bf16.gmra.mxu0 %v133
    %v402 = vpop.f32.mrf.mxu0
    %v403 = vadd.f32 %v295, %v402
    %v404 = vpop.f32.mrf.mxu0
    %v405 = vadd.f32 %v295, %v404
    %406 = vdwg.mxu0
    %407 = vmatpush.bf16.msra.mxu0 %v376
    %408 = vmatpush.bf16.msra.mxu0 %v375
    %409 = vmatpush.bf16.msra.mxu0 %v374
    %410 = vmatpush.bf16.msra.mxu0 %v373
    %411 = vmatpush.bf16.msra.mxu0 %v372
    %412 = vmatpush.bf16.msra.mxu0 %v371
    %413 = vmatpush.bf16.msra.mxu0 %v370
    %414 = vmatpush.bf16.msra.mxu0 %v369
    %415 = vmatmul.bf16.gmra.mxu0 %v134
    %v416 = vpop.f32.mrf.mxu0
    %v417 = vadd.f32 %v403, %v416
    %v418 = vpop.f32.mrf.mxu0
    %v419 = vadd.f32 %v405, %v418
    %420 = vdwg.mxu0
    %v421 = vmul.f32 %v257, 0.5
    %v422 = vmul.f32 %v259, 0.5
    %v423 = vtanh.pop %v421
    %v424 = vtanh.pop %v422
    %v425 = vadd.f32 %v423, 1.0
    %v426 = vadd.f32 %v424, 1.0
    %v427 = vmul.f32 %v425, 0.5
    %v428 = vmul.f32 %v426, 0.5
    %v429 = vtanh.pop %v417
    %v430 = vtanh.pop %v419
    %v431 = vsub.f32 %v429, %v89
    %v432 = vsub.f32 %v430, %v90
    %v433 = vmul.f32 %v427, %v431
    %v434 = vmul.f32 %v428, %v432
    %v435 = vmul.f32 %v433, 0.1
    %v436 = vmul.f32 %v434, 0.1
    %v437 = vadd.f32 %v89, %v435
    %v438 = vadd.f32 %v90, %v436
    %439 = vst [vmem:[#allocation10] sm:$0xff] %v437
    %440 = vst [vmem:[#allocation10 + $0x8] sm:$0xff] %v438
    // Predicated region
    $region42: #{tpu_custom_call.1} parent=1 // pred_check
      _
    $region43: #{tpu_custom_call.1} parent=1 // pred_check_branch
      %442 = sbr.rel (0) target = $region45
    $region44: #{tpu_custom_call.1} parent=1 // pred_region
      %444 = vsyncadd [#allocation4], 0
      %s445 = sshll.u32 [#allocation10], 4
      %s446 = int_to_ptr.vmem [resolvable:$true] %s445
      %s447 = sshll.u32 %s6, 4
      %s448 = int_to_ptr.hbm [resolvable:$true] %s447
      %453 = dma.vmem_to_hbm [thread:$0]  %s446, 256, %s448, [#allocation4], 128, 128, 8
    $region45: #{tpu_custom_call.1} parent=1 // pred_fallthru
      _
    // Predicated region
    $region46: #{tpu_custom_call.1} parent=1 // pred_check
      _
    $region47: #{tpu_custom_call.1} parent=1 // pred_check_branch
      %455 = sbr.rel (0) target = $region49
    $region48: #{tpu_custom_call.1} parent=1 // pred_region
      %457 = dma.done [#allocation4], 256
    $region49: #{tpu_custom_call.1} parent=1 // pred_fallthru
      _
    %458 = vsyncpa [#allocation3], 1
    %459 = vsyncpa [#allocation6], 1
    %460 = vsyncpa [#allocation9], 1
    %461 = vsyncpa [#allocation4], 1

</llo_original>
